<compile_context>
chip_gen: v6e
topology: v6e:2x2x1
jax: 0.10.0
libtpu: 0.0.40
codegen_flags: <defaults>
</compile_context>

<pallas_src>
import functools

import jax
import jax.numpy as jnp
from jax.experimental import pallas as pl
from jax.experimental.pallas import tpu as pltpu

IN_FEATURES = 4 + 256   # 260
HIDDEN = 32
OUT_FEATURES = 1


def _round_up(v: int, m: int) -> int:
    return ((v + m - 1) // m) * m


def selector_kernel(x_ref, w1_ref, b1_ref, w2_ref, b2_ref, o_ref):
    # In-kernel bf16 cast (VPU) keeps HBM traffic at one f32 read of x while the
    # MXU still gets bf16 operands (minimal K-passes, f32 accumulation).
    xb = x_ref[...].astype(jnp.bfloat16)                         # (tm, 260)
    h = jnp.dot(xb, w1_ref[...], preferred_element_type=jnp.float32)
    h = jnp.maximum(h + b1_ref[...], 0.0)                        # bias + ReLU in f32
    # TODO(synk): Dropout(p=0.2) is identity in eval mode; training-mode masking
    # (pltpu.prng_seed + stateful_bernoulli with 1/(1-p) scaling) is not applied.
    # fc2 computed transposed: (1, 32) @ (tm, 32)^T -> (1, tm).  Per-row results
    # land lane-dense, so the store is one wide unmasked write instead of a
    # (tm, 1) column of masked single-lane stores.
    y = jax.lax.dot_general(
        w2_ref[...], h,
        dimension_numbers=(((1,), (1,)), ((), ())),
        preferred_element_type=jnp.float32)                      # (1, tm)
    o_ref[...] = (y + b2_ref[0]).astype(o_ref.dtype)


@functools.partial(jax.jit, static_argnames=("tm", "min_pallas_rows"))
def selector_forward(x, w1_t, b1, w2_t, b2, *, tm=8192, min_pallas_rows=4096):
    """x: (N, 260) f32; w1_t: (260, 32); b1: (32,); w2_t: (32, 1); b2: (1,)."""
    N, F = x.shape
    assert F == IN_FEATURES

    # Tiny batches: the pallas_call fixed cost dominates; fused XLA matmul wins.
    if N < min_pallas_rows:
        h = jnp.maximum(x @ w1_t + b1, 0.0)
        return (h @ w2_t + b2).astype(jnp.float32)

    # Tile choice: as large as requested (mem-bound kernel), 128-aligned so the
    # lane-dense output block is legal; for a given N pick the smallest
    # 128-multiple tile that keeps the same number of blocks, so the
    # partial-last-block waste stays < 128 rows per block.
    tm_cap = _round_up(tm, 128)
    n_blocks = -(-N // tm_cap)
    tm_eff = _round_up(-(-N // n_blocks), 128)
    n_pad = n_blocks * tm_eff

    # Weights are tiny (16 KiB); casting/reshaping them in the wrapper is noise.
    w1_b = w1_t.astype(jnp.bfloat16)                        # (260, 32)
    b1_2d = b1.reshape(1, HIDDEN).astype(jnp.float32)       # (1, 32)
    w2_row = w2_t.reshape(1, HIDDEN).astype(jnp.float32)    # (32, 1) -> (1, 32)
    b2_s = b2.reshape(OUT_FEATURES).astype(jnp.float32)     # (1,) scalar in SMEM

    cost = pl.CostEstimate(
        flops=2 * N * IN_FEATURES * HIDDEN + 2 * N * HIDDEN,
        transcendentals=0,
        bytes_accessed=(N * IN_FEATURES * 4           # x read once, f32
                        + IN_FEATURES * HIDDEN * 2    # w1 (bf16)
                        + n_pad * 4),                 # lane-dense f32 output
    )

    out = pl.pallas_call(
        selector_kernel,
        out_shape=jax.ShapeDtypeStruct((1, n_pad), jnp.float32),
        grid_spec=pltpu.PrefetchScalarGridSpec(
            num_scalar_prefetch=0,
            grid=(n_blocks,),
            in_specs=[
                # x rows tile; last block may read past N (garbage rows are
                # discarded by the wrapper slice and feed no cross-row reduction).
                pl.BlockSpec((tm_eff, F), lambda i: (i, 0)),
                pl.BlockSpec((F, HIDDEN), lambda i: (0, 0)),        # W1^T (resident)
                pl.BlockSpec((1, HIDDEN), lambda i: (0, 0)),        # b1
                pl.BlockSpec((1, HIDDEN), lambda i: (0, 0)),        # w2 as a row
                pl.BlockSpec(memory_space=pltpu.MemorySpace.SMEM),  # b2 scalar
            ],
            out_specs=pl.BlockSpec((1, tm_eff), lambda i: (0, i)),
        ),
        compiler_params=pltpu.CompilerParams(
            dimension_semantics=("parallel",),
            vmem_limit_bytes=48 * 1024 * 1024,   # fits v7x's 64 MiB with headroom
        ),
        cost_estimate=cost,
    )(x, w1_b, b1_2d, w2_row, b2_s)

    return out[0, :N].reshape(N, OUT_FEATURES)


def reference_forward(x, w1_t, b1, w2_t, b2):
    h = jnp.maximum(x @ w1_t + b1, 0.0)
    return h @ w2_t + b2


if __name__ == "__main__":
    key = jax.random.PRNGKey(0)
    k_x, k_w1, k_b1, k_w2, k_b2 = jax.random.split(key, 5)

    # Small, non-128-aligned batch to exercise the partial-last-block path.
    N = 300
    x = jax.random.normal(k_x, (N, IN_FEATURES), dtype=jnp.float32)

    # Deterministic init mimicking nn.Linear's uniform(-1/sqrt(fan_in), 1/sqrt(fan_in)).
    bound1 = 1.0 / jnp.sqrt(jnp.float32(IN_FEATURES))
    w1_t = jax.random.uniform(k_w1, (IN_FEATURES, HIDDEN), jnp.float32,
                              minval=-bound1, maxval=bound1)
    b1 = jax.random.uniform(k_b1, (HIDDEN,), jnp.float32,
                            minval=-bound1, maxval=bound1)
    bound2 = 1.0 / jnp.sqrt(jnp.float32(HIDDEN))
    w2_t = jax.random.uniform(k_w2, (HIDDEN, OUT_FEATURES), jnp.float32,
                              minval=-bound2, maxval=bound2)
    b2 = jax.random.uniform(k_b2, (OUT_FEATURES,), jnp.float32,
                            minval=-bound2, maxval=bound2)

    ref = reference_forward(x, w1_t, b1, w2_t, b2)

    # Force the Pallas path (the production default routes tiny N to a fused
    # XLA matmul fast path).
    out = selector_forward(x, w1_t, b1, w2_t, b2, min_pallas_rows=0)
    out = jax.block_until_ready(out)
    assert out.shape == (N, OUT_FEATURES)
    # bf16 MXU operands (f32 accumulation) -> loosen tolerance vs. pure-f32 ref.
    assert jnp.allclose(out, ref, atol=2e-2, rtol=2e-2), (
        float(jnp.max(jnp.abs(out - ref))))

    # Sanity-check the small-N fast path as well (pure XLA, tight tolerance).
    out_fast = jax.block_until_ready(selector_forward(x, w1_t, b1, w2_t, b2))
    assert jnp.allclose(out_fast, ref, atol=1e-5, rtol=1e-5)

    print("KERNEL_OK")
</pallas_src>

<mosaic_0001>
module attributes {stable_mosaic.version = 11 : i64} {
  func.func @selector_kernel(%arg0: i32, %arg1: memref<384x260xf32, #tpu.memory_space<vmem>>, %arg2: memref<260x32xbf16, #tpu.memory_space<vmem>>, %arg3: memref<1x32xf32, #tpu.memory_space<vmem>>, %arg4: memref<1x32xf32, #tpu.memory_space<vmem>>, %arg5: memref<1xf32, #tpu.memory_space<smem>>, %arg6: memref<1x384xf32, #tpu.memory_space<vmem>>) attributes {dimension_semantics = [#tpu.dimension_semantics<parallel>], iteration_bounds = array<i64: 1>, scalar_prefetch = 0 : i64, scratch_operands = 0 : i64, tpu.core_type = #tpu.core_type<tc>, window_params = [{transform_indices = @transform_0, window_bounds = array<i64: 384, 260>}, {pipeline_mode = #tpu.pipeline_mode<synchronous>, transform_indices = @transform_1, window_bounds = array<i64: 260, 32>}, {pipeline_mode = #tpu.pipeline_mode<synchronous>, transform_indices = @transform_2, window_bounds = array<i64: 1, 32>}, {pipeline_mode = #tpu.pipeline_mode<synchronous>, transform_indices = @transform_3, window_bounds = array<i64: 1, 32>}, {transform_indices = @transform_4, window_bounds = array<i64: 1>}, {transform_indices = @transform_5, window_bounds = array<i64: 1, 384>}]} {
    %c0 = arith.constant 0 : index
    %c0_0 = arith.constant 0 : index
    %0 = vector.load %arg1[%c0, %c0_0] : memref<384x260xf32, #tpu.memory_space<vmem>>, vector<384x260xf32>
    %1 = arith.truncf %0 : vector<384x260xf32> to vector<384x260xbf16>
    %c0_1 = arith.constant 0 : index
    %c0_2 = arith.constant 0 : index
    %2 = vector.load %arg2[%c0_1, %c0_2] : memref<260x32xbf16, #tpu.memory_space<vmem>>, vector<260x32xbf16>
    %cst = arith.constant dense<0.000000e+00> : vector<384x32xf32>
    %3 = tpu.matmul %1, %2, %cst {dimension_numbers = #tpu.dot_dimension_numbers<[1], [0], [0], [1], [0, 0, 1, 1], [], []>} : vector<384x260xbf16>, vector<260x32xbf16>, vector<384x32xf32> -> vector<384x32xf32>
    %c0_3 = arith.constant 0 : index
    %c0_4 = arith.constant 0 : index
    %4 = vector.load %arg3[%c0_3, %c0_4] : memref<1x32xf32, #tpu.memory_space<vmem>>, vector<1x32xf32>
    %5 = vector.broadcast %4 : vector<1x32xf32> to vector<384x32xf32>
    %6 = arith.addf %3, %5 : vector<384x32xf32>
    %cst_5 = arith.constant 0.000000e+00 : f32
    %7 = vector.broadcast %cst_5 : f32 to vector<384x32xf32>
    %8 = arith.maximumf %6, %7 : vector<384x32xf32>
    %c0_6 = arith.constant 0 : index
    %c0_7 = arith.constant 0 : index
    %9 = vector.load %arg4[%c0_6, %c0_7] : memref<1x32xf32, #tpu.memory_space<vmem>>, vector<1x32xf32>
    %cst_8 = arith.constant dense<0.000000e+00> : vector<1x384xf32>
    %10 = tpu.matmul %9, %8, %cst_8 {dimension_numbers = #tpu.dot_dimension_numbers<[1], [1], [0], [0], [0, 0, 1, 0], [], []>} : vector<1x32xf32>, vector<384x32xf32>, vector<1x384xf32> -> vector<1x384xf32>
    %c0_9 = arith.constant 0 : index
    %11 = memref.load %arg5[%c0_9] : memref<1xf32, #tpu.memory_space<smem>>
    %12 = vector.broadcast %11 : f32 to vector<1x384xf32>
    %13 = arith.addf %10, %12 : vector<1x384xf32>
    %c0_10 = arith.constant 0 : index
    %c0_11 = arith.constant 0 : index
    %14 = vector.load %arg6[%c0_10, %c0_11] : memref<1x384xf32, #tpu.memory_space<vmem>>, vector<1x384xf32>
    tpu.vector_store %arg6[%c0_10, %c0_11], %13 {strides = array<i32>} : memref<1x384xf32, #tpu.memory_space<vmem>>, vector<1x384xf32>,
    return
  }
  func.func @transform_0(%arg0: i32) -> (i32, i32) {
    %c0_i32 = arith.constant 0 : i32
    %c0_i32_0 = arith.constant 0 : i32
    return %arg0, %c0_i32 : i32, i32
  }
  func.func @transform_1(%arg0: i32) -> (i32, i32) {
    %c0_i32 = arith.constant 0 : i32
    %c0_i32_0 = arith.constant 0 : i32
    %c0_i32_1 = arith.constant 0 : i32
    return %c0_i32, %c0_i32_0 : i32, i32
  }
  func.func @transform_2(%arg0: i32) -> (i32, i32) {
    %c0_i32 = arith.constant 0 : i32
    %c0_i32_0 = arith.constant 0 : i32
    %c0_i32_1 = arith.constant 0 : i32
    return %c0_i32, %c0_i32_0 : i32, i32
  }
  func.func @transform_3(%arg0: i32) -> (i32, i32) {
    %c0_i32 = arith.constant 0 : i32
    %c0_i32_0 = arith.constant 0 : i32
    %c0_i32_1 = arith.constant 0 : i32
    return %c0_i32, %c0_i32_0 : i32, i32
  }
  func.func @transform_4(%arg0: i32) -> i32 {
    %c0_i32 = arith.constant 0 : i32
    %c0_i32_0 = arith.constant 0 : i32
    return %c0_i32 : i32
  }
  func.func @transform_5(%arg0: i32) -> (i32, i32) {
    %c0_i32 = arith.constant 0 : i32
    %c0_i32_0 = arith.constant 0 : i32
    return %c0_i32, %arg0 : i32, i32
  }
}

</mosaic_0001>

<llo_original>
// kernel: selector_forward.1
$region0: #{selector_forward.1}
  #allocation0 [shape = 'u32[]', space=smem, size = 0x4, offset = 0x4, fixed_abs, tag = 'smem constant byte address 0x4 - core index']
  #allocation1 [shape = 'u32[144,128]{1,0:T(1,128)}', space=vmem, size = 0x12000, scoped, tag = 'internal scratch']
  #allocation2 [shape = 'f32[1]{0:T(128)S(6)}', space=smem, size = 0x200, scoped, tag = 'scoped memory for selector_forward.1']
  %s0 = inlined_call_operand.vmem [shape: f32[300,260], index: 0, kind: input, shape index: {}]
  %s1 = inlined_call_operand.vmem [shape: bf16[260,32], index: 1, kind: input, shape index: {}]
  %s2 = inlined_call_operand.vmem [shape: f32[1,32], index: 2, kind: input, shape index: {}]
  %s3 = inlined_call_operand.vmem [shape: f32[1,32], index: 3, kind: input, shape index: {}]
  %s4 = inlined_call_operand.<no memory space> [shape: f32[1], index: 4, kind: input, shape index: {}]
  %s5 = inlined_call_operand.vmem [shape: f32[1,384], index: 5, kind: output, shape index: {}]
  %s6 = sld [smem:[#allocation0]]
  $region30: #{selector_forward.1} parent=0
    _
  %s8 = ssub.s32 1, %s6
  %s9 = scalar_select 0, %s8, %s6
  %10 = sst [smem:[#allocation2]] %s4
  // Predicated region
  $region2: #{selector_forward.1} parent=0 // pred_check
    _
  $region3: #{selector_forward.1} parent=0 // pred_check_branch
    %12 = sbr.rel (0) target = $region5
  $region4: #{selector_forward.1} parent=0 // pred_region
    _
  $region5: #{selector_forward.1} parent=0 // pred_fallthru
    _
  // Predicated region
  $region6: #{selector_forward.1} parent=0 // pred_check
    _
  $region7: #{selector_forward.1} parent=0 // pred_check_branch
    %14 = sbr.rel (0) target = $region9
  $region8: #{selector_forward.1} parent=0 // pred_region
    _
  $region9: #{selector_forward.1} parent=0 // pred_fallthru
    _
  // Predicated region
  $region10: #{selector_forward.1} parent=0 // pred_check
    _
  $region11: #{selector_forward.1} parent=0 // pred_check_branch
    %16 = sbr.rel (0) target = $region13
  $region12: #{selector_forward.1} parent=0 // pred_region
    _
  $region13: #{selector_forward.1} parent=0 // pred_fallthru
    _
  // Predicated region
  $region14: #{selector_forward.1} parent=0 // pred_check
    _
  $region15: #{selector_forward.1} parent=0 // pred_check_branch
    %18 = sbr.rel (0) target = $region17
  $region16: #{selector_forward.1} parent=0 // pred_region
    _
  $region17: #{selector_forward.1} parent=0 // pred_fallthru
    _
  // Predicated region
  $region18: #{selector_forward.1} parent=0 // pred_check
    _
  $region19: #{selector_forward.1} parent=0 // pred_check_branch
    %20 = sbr.rel (0) target = $region21
  $region20: #{selector_forward.1} parent=0 // pred_region
    _
  $region21: #{selector_forward.1} parent=0 // pred_fallthru
    _
  %v22 = vld [vmem:[%s0] sm:$0xff]
  %v23 = vld [vmem:[%s0 + $0x8] sm:$0xff]
  %v24 = vld [vmem:[%s0 + $0x10] sm:$0xff]
  %v25 = vld [vmem:[%s0 + $0x18] sm:$0xff]
  %v26 = vld [vmem:[%s0 + $0x20] sm:$0xff]
  %v27 = vld [vmem:[%s0 + $0x28] sm:$0xff]
  %v28 = vld [vmem:[%s0 + $0x30] sm:$0xff]
  %v29 = vld [vmem:[%s0 + $0x38] sm:$0xff]
  %v30 = vld [vmem:[%s0 + $0x40] sm:$0xff]
  %v31 = vld [vmem:[%s0 + $0x48] sm:$0xff]
  %v32 = vld [vmem:[%s0 + $0x50] sm:$0xff]
  %v33 = vld [vmem:[%s0 + $0x58] sm:$0xff]
  %v34 = vld [vmem:[%s0 + $0x60] sm:$0xff]
  %v35 = vld [vmem:[%s0 + $0x68] sm:$0xff]
  %v36 = vld [vmem:[%s0 + $0x70] sm:$0xff]
  %v37 = vld [vmem:[%s0 + $0x78] sm:$0xff]
  %v38 = vld [vmem:[%s0 + $0x80] sm:$0xff]
  %v39 = vld [vmem:[%s0 + $0x88] sm:$0xff]
  %v40 = vld [vmem:[%s0 + $0x90] sm:$0xff]
  %v41 = vld [vmem:[%s0 + $0x98] sm:$0xff]
  %v42 = vld [vmem:[%s0 + $0xa0] sm:$0xff]
  %v43 = vld [vmem:[%s0 + $0xa8] sm:$0xff]
  %v44 = vld [vmem:[%s0 + $0xb0] sm:$0xff]
  %v45 = vld [vmem:[%s0 + $0xb8] sm:$0xff]
  %v46 = vld [vmem:[%s0 + $0xc0] sm:$0xff]
  %v47 = vld [vmem:[%s0 + $0xc8] sm:$0xff]
  %v48 = vld [vmem:[%s0 + $0xd0] sm:$0xff]
  %v49 = vld [vmem:[%s0 + $0xd8] sm:$0xff]
  %v50 = vld [vmem:[%s0 + $0xe0] sm:$0xff]
  %v51 = vld [vmem:[%s0 + $0xe8] sm:$0xff]
  %v52 = vld [vmem:[%s0 + $0xf0] sm:$0xff]
  %v53 = vld [vmem:[%s0 + $0xf8] sm:$0xff]
  %v54 = vld [vmem:[%s0 + $0x100] sm:$0xff]
  %v55 = vld [vmem:[%s0 + $0x108] sm:$0xff]
  %v56 = vld [vmem:[%s0 + $0x110] sm:$0xff]
  %v57 = vld [vmem:[%s0 + $0x118] sm:$0xff]
  %v58 = vld [vmem:[%s0 + $0x120] sm:$0xff]
  %v59 = vld [vmem:[%s0 + $0x128] sm:$0xff]
  %v60 = vld [vmem:[%s0 + $0x130] sm:$0xff]
  %v61 = vld [vmem:[%s0 + $0x138] sm:$0xff]
  %v62 = vld [vmem:[%s0 + $0x140] sm:$0xff]
  %v63 = vld [vmem:[%s0 + $0x148] sm:$0xff]
  %v64 = vld [vmem:[%s0 + $0x150] sm:$0xff]
  %v65 = vld [vmem:[%s0 + $0x158] sm:$0xff]
  %v66 = vld [vmem:[%s0 + $0x160] sm:$0xff]
  %v67 = vld [vmem:[%s0 + $0x168] sm:$0xff]
  %v68 = vld [vmem:[%s0 + $0x170] sm:$0xff]
  %v69 = vld [vmem:[%s0 + $0x178] sm:$0xff]
  %v70 = vld [vmem:[%s0 + $0x180] sm:$0xff]
  %v71 = vld [vmem:[%s0 + $0x188] sm:$0xff]
  %v72 = vld [vmem:[%s0 + $0x190] sm:$0xff]
  %v73 = vld [vmem:[%s0 + $0x198] sm:$0xff]
  %v74 = vld [vmem:[%s0 + $0x1a0] sm:$0xff]
  %v75 = vld [vmem:[%s0 + $0x1a8] sm:$0xff]
  %v76 = vld [vmem:[%s0 + $0x1b0] sm:$0xff]
  %v77 = vld [vmem:[%s0 + $0x1b8] sm:$0xff]
  %v78 = vld [vmem:[%s0 + $0x1c0] sm:$0xff]
  %v79 = vld [vmem:[%s0 + $0x1c8] sm:$0xff]
  %v80 = vld [vmem:[%s0 + $0x1d0] sm:$0xff]
  %v81 = vld [vmem:[%s0 + $0x1d8] sm:$0xff]
  %v82 = vld [vmem:[%s0 + $0x1e0] sm:$0xff]
  %v83 = vld [vmem:[%s0 + $0x1e8] sm:$0xff]
  %v84 = vld [vmem:[%s0 + $0x1f0] sm:$0xff]
  %v85 = vld [vmem:[%s0 + $0x1f8] sm:$0xff]
  %v86 = vld [vmem:[%s0 + $0x200] sm:$0xff]
  %v87 = vld [vmem:[%s0 + $0x208] sm:$0xff]
  %v88 = vld [vmem:[%s0 + $0x210] sm:$0xff]
  %v89 = vld [vmem:[%s0 + $0x218] sm:$0xff]
  %v90 = vld [vmem:[%s0 + $0x220] sm:$0xff]
  %v91 = vld [vmem:[%s0 + $0x228] sm:$0xff]
  %v92 = vld [vmem:[%s0 + $0x230] sm:$0xff]
  %v93 = vld [vmem:[%s0 + $0x238] sm:$0xff]
  %v94 = vld [vmem:[%s0 + $0x240] sm:$0xff]
  %v95 = vld [vmem:[%s0 + $0x248] sm:$0xff]
  %v96 = vld [vmem:[%s0 + $0x250] sm:$0xff]
  %v97 = vld [vmem:[%s0 + $0x258] sm:$0xff]
  %v98 = vld [vmem:[%s0 + $0x260] sm:$0xff]
  %v99 = vld [vmem:[%s0 + $0x268] sm:$0xff]
  %v100 = vld [vmem:[%s0 + $0x270] sm:$0xff]
  %v101 = vld [vmem:[%s0 + $0x278] sm:$0xff]
  %v102 = vld [vmem:[%s0 + $0x280] sm:$0xff]
  %v103 = vld [vmem:[%s0 + $0x288] sm:$0xff]
  %v104 = vld [vmem:[%s0 + $0x290] sm:$0xff]
  %v105 = vld [vmem:[%s0 + $0x298] sm:$0xff]
  %v106 = vld [vmem:[%s0 + $0x2a0] sm:$0xff]
  %v107 = vld [vmem:[%s0 + $0x2a8] sm:$0xff]
  %v108 = vld [vmem:[%s0 + $0x2b0] sm:$0xff]
  %v109 = vld [vmem:[%s0 + $0x2b8] sm:$0xff]
  %v110 = vld [vmem:[%s0 + $0x2c0] sm:$0xff]
  %v111 = vld [vmem:[%s0 + $0x2c8] sm:$0xff]
  %v112 = vld [vmem:[%s0 + $0x2d0] sm:$0xff]
  %v113 = vld [vmem:[%s0 + $0x2d8] sm:$0xff]
  %v114 = vld [vmem:[%s0 + $0x2e0] sm:$0xff]
  %v115 = vld [vmem:[%s0 + $0x2e8] sm:$0xff]
  %v116 = vld [vmem:[%s0 + $0x2f0] sm:$0xff]
  %v117 = vld [vmem:[%s0 + $0x2f8] sm:$0xff]
  %v118 = vld [vmem:[%s0 + $0x300] sm:$0xff]
  %v119 = vld [vmem:[%s0 + $0x308] sm:$0xff]
  %v120 = vld [vmem:[%s0 + $0x310] sm:$0xff]
  %v121 = vld [vmem:[%s0 + $0x318] sm:$0xff]
  %v122 = vld [vmem:[%s0 + $0x320] sm:$0xff]
  %v123 = vld [vmem:[%s0 + $0x328] sm:$0xff]
  %v124 = vld [vmem:[%s0 + $0x330] sm:$0xff]
  %v125 = vld [vmem:[%s0 + $0x338] sm:$0xff]
  %v126 = vld [vmem:[%s0 + $0x340] sm:$0xff]
  %v127 = vld [vmem:[%s0 + $0x348] sm:$0xff]
  %v128 = vld [vmem:[%s0 + $0x350] sm:$0xff]
  %v129 = vld [vmem:[%s0 + $0x358] sm:$0xff]
  %v130 = vld [vmem:[%s0 + $0x360] sm:$0xff]
  %v131 = vld [vmem:[%s0 + $0x368] sm:$0xff]
  %v132 = vld [vmem:[%s0 + $0x370] sm:$0xff]
  %v133 = vld [vmem:[%s0 + $0x378] sm:$0xff]
  %v134 = vld [vmem:[%s0 + $0x380] sm:$0xff]
  %v135 = vld [vmem:[%s0 + $0x388] sm:$0xff]
  %v136 = vld [vmem:[%s0 + $0x390] sm:$0xff]
  %v137 = vld [vmem:[%s0 + $0x398] sm:$0xff]
  %v138 = vld [vmem:[%s0 + $0x3a0] sm:$0xff]
  %v139 = vld [vmem:[%s0 + $0x3a8] sm:$0xff]
  %v140 = vld [vmem:[%s0 + $0x3b0] sm:$0xff]
  %v141 = vld [vmem:[%s0 + $0x3b8] sm:$0xff]
  %v142 = vld [vmem:[%s0 + $0x3c0] sm:$0xff]
  %v143 = vld [vmem:[%s0 + $0x3c8] sm:$0xff]
  %v144 = vld [vmem:[%s0 + $0x3d0] sm:$0xff]
  %v145 = vld [vmem:[%s0 + $0x3d8] sm:$0xff]
  %v146 = vld [vmem:[%s0 + $0x3e0] sm:$0xff]
  %v147 = vld [vmem:[%s0 + $0x3e8] sm:$0xff]
  %v148 = vld [vmem:[%s0 + $0x3f0] sm:$0xff]
  %v149 = vld [vmem:[%s0 + $0x3f8] sm:$0xff]
  %v150 = vld [vmem:[%s0 + $0x400] sm:$0xff]
  %v151 = vld [vmem:[%s0 + $0x408] sm:$0xff]
  %v152 = vld [vmem:[%s0 + $0x410] sm:$0xff]
  %v153 = vld [vmem:[%s0 + $0x418] sm:$0xff]
  %v154 = vld [vmem:[%s0 + $0x420] sm:$0xff]
  %v155 = vld [vmem:[%s0 + $0x428] sm:$0xff]
  %v156 = vld [vmem:[%s0 + $0x430] sm:$0xff]
  %v157 = vld [vmem:[%s0 + $0x438] sm:$0xff]
  %v158 = vld [vmem:[%s0 + $0x440] sm:$0xff]
  %v159 = vld [vmem:[%s0 + $0x448] sm:$0xff]
  %v160 = vld [vmem:[%s0 + $0x450] sm:$0xff]
  %v161 = vld [vmem:[%s0 + $0x458] sm:$0xff]
  %v162 = vld [vmem:[%s0 + $0x460] sm:$0xff]
  %v163 = vld [vmem:[%s0 + $0x468] sm:$0xff]
  %v164 = vld [vmem:[%s0 + $0x470] sm:$0xff]
  %v165 = vld [vmem:[%s0 + $0x478] sm:$0xff]
  %v166 = vpack.c.bf16 %v25, %v22
  %v167 = vpack.c.bf16 %v26, %v23
  %v168 = vpack.c.bf16 %v27, %v24
  %v169 = vpack.c.bf16 %v31, %v28
  %v170 = vpack.c.bf16 %v32, %v29
  %v171 = vpack.c.bf16 %v33, %v30
  %v172 = vpack.c.bf16 %v37, %v34
  %v173 = vpack.c.bf16 %v38, %v35
  %v174 = vpack.c.bf16 %v39, %v36
  %v175 = vpack.c.bf16 %v43, %v40
  %v176 = vpack.c.bf16 %v44, %v41
  %v177 = vpack.c.bf16 %v45, %v42
  %v178 = vpack.c.bf16 %v49, %v46
  %v179 = vpack.c.bf16 %v50, %v47
  %v180 = vpack.c.bf16 %v51, %v48
  %v181 = vpack.c.bf16 %v55, %v52
  %v182 = vpack.c.bf16 %v56, %v53
  %v183 = vpack.c.bf16 %v57, %v54
  %v184 = vpack.c.bf16 %v61, %v58
  %v185 = vpack.c.bf16 %v62, %v59
  %v186 = vpack.c.bf16 %v63, %v60
  %v187 = vpack.c.bf16 %v67, %v64
  %v188 = vpack.c.bf16 %v68, %v65
  %v189 = vpack.c.bf16 %v69, %v66
  %v190 = vpack.c.bf16 %v73, %v70
  %v191 = vpack.c.bf16 %v74, %v71
  %v192 = vpack.c.bf16 %v75, %v72
  %v193 = vpack.c.bf16 %v79, %v76
  %v194 = vpack.c.bf16 %v80, %v77
  %v195 = vpack.c.bf16 %v81, %v78
  %v196 = vpack.c.bf16 %v85, %v82
  %v197 = vpack.c.bf16 %v86, %v83
  %v198 = vpack.c.bf16 %v87, %v84
  %v199 = vpack.c.bf16 %v91, %v88
  %v200 = vpack.c.bf16 %v92, %v89
  %v201 = vpack.c.bf16 %v93, %v90
  %v202 = vpack.c.bf16 %v97, %v94
  %v203 = vpack.c.bf16 %v98, %v95
  %v204 = vpack.c.bf16 %v99, %v96
  %v205 = vpack.c.bf16 %v103, %v100
  %v206 = vpack.c.bf16 %v104, %v101
  %v207 = vpack.c.bf16 %v105, %v102
  %v208 = vpack.c.bf16 %v109, %v106
  %v209 = vpack.c.bf16 %v110, %v107
  %v210 = vpack.c.bf16 %v111, %v108
  %v211 = vpack.c.bf16 %v115, %v112
  %v212 = vpack.c.bf16 %v116, %v113
  %v213 = vpack.c.bf16 %v117, %v114
  %v214 = vpack.c.bf16 %v121, %v118
  %v215 = vpack.c.bf16 %v122, %v119
  %v216 = vpack.c.bf16 %v123, %v120
  %v217 = vpack.c.bf16 %v127, %v124
  %v218 = vpack.c.bf16 %v128, %v125
  %v219 = vpack.c.bf16 %v129, %v126
  %v220 = vpack.c.bf16 %v133, %v130
  %v221 = vpack.c.bf16 %v134, %v131
  %v222 = vpack.c.bf16 %v135, %v132
  %v223 = vpack.c.bf16 %v139, %v136
  %v224 = vpack.c.bf16 %v140, %v137
  %v225 = vpack.c.bf16 %v141, %v138
  %v226 = vpack.c.bf16 %v145, %v142
  %v227 = vpack.c.bf16 %v146, %v143
  %v228 = vpack.c.bf16 %v147, %v144
  %v229 = vpack.c.bf16 %v151, %v148
  %v230 = vpack.c.bf16 %v152, %v149
  %v231 = vpack.c.bf16 %v153, %v150
  %v232 = vpack.c.bf16 %v157, %v154
  %v233 = vpack.c.bf16 %v158, %v155
  %v234 = vpack.c.bf16 %v159, %v156
  %v235 = vpack.c.bf16 %v163, %v160
  %v236 = vpack.c.bf16 %v164, %v161
  %v237 = vpack.c.bf16 %v165, %v162
  %v238 = vld [vmem:[%s1] sm:$0xf]
  %v239 = vld [vmem:[%s1 + $0x4] sm:$0xf]
  %v240 = vld [vmem:[%s1 + $0x8] sm:$0xf]
  %v241 = vld [vmem:[%s1 + $0xc] sm:$0xf]
  %v242 = vld [vmem:[%s1 + $0x10] sm:$0xf]
  %v243 = vld [vmem:[%s1 + $0x14] sm:$0xf]
  %v244 = vld [vmem:[%s1 + $0x18] sm:$0xf]
  %v245 = vld [vmem:[%s1 + $0x1c] sm:$0xf]
  %v246 = vld [vmem:[%s1 + $0x20] sm:$0xf]
  %v247 = vld [vmem:[%s1 + $0x24] sm:$0xf]
  %v248 = vld [vmem:[%s1 + $0x28] sm:$0xf]
  %v249 = vld [vmem:[%s1 + $0x2c] sm:$0xf]
  %v250 = vld [vmem:[%s1 + $0x30] sm:$0xf]
  %v251 = vld [vmem:[%s1 + $0x34] sm:$0xf]
  %v252 = vld [vmem:[%s1 + $0x38] sm:$0xf]
  %v253 = vld [vmem:[%s1 + $0x3c] sm:$0xf]
  %v254 = vld [vmem:[%s1 + $0x40] sm:$0xf]
  %v255 = vld [vmem:[%s1 + $0x44] sm:$0xf]
  %v256 = vld [vmem:[%s1 + $0x48] sm:$0xf]
  %v257 = vld [vmem:[%s1 + $0x4c] sm:$0xf]
  %v258 = vld [vmem:[%s1 + $0x50] sm:$0xf]
  %v259 = vld [vmem:[%s1 + $0x54] sm:$0xf]
  %v260 = vld [vmem:[%s1 + $0x58] sm:$0xf]
  %v261 = vld [vmem:[%s1 + $0x5c] sm:$0xf]
  %v262 = vld [vmem:[%s1 + $0x60] sm:$0xf]
  %v263 = vld [vmem:[%s1 + $0x64] sm:$0xf]
  %v264 = vld [vmem:[%s1 + $0x68] sm:$0xf]
  %v265 = vld [vmem:[%s1 + $0x6c] sm:$0xf]
  %v266 = vld [vmem:[%s1 + $0x70] sm:$0xf]
  %v267 = vld [vmem:[%s1 + $0x74] sm:$0xf]
  %v268 = vld [vmem:[%s1 + $0x78] sm:$0xf]
  %v269 = vld [vmem:[%s1 + $0x7c] sm:$0xf]
  %v270 = vld [vmem:[%s1 + $0x80] sm:$0x3]
  %v271 = vld [vmem:[%s2] sm:$0x1]
  %v273 = vlaneseq
  %v274 = vshrl.u32 %v273, 7
  %v275 = vsub.s32 0, %v274
  %v276 = vrot.slane %v271, %v275
  %v311 = vunpack.c.l.b16 %v238
  %v312 = vunpack.c.l.b16 %v239
  %v313 = vunpack.c.l.b16 %v240
  %v314 = vunpack.c.l.b16 %v241
  %v315 = vunpack.c.l.b16 %v242
  %v316 = vunpack.c.l.b16 %v243
  %v317 = vunpack.c.l.b16 %v244
  %v318 = vunpack.c.l.b16 %v245
  %v319 = vunpack.c.l.b16 %v246
  %v320 = vunpack.c.l.b16 %v247
  %v321 = vunpack.c.l.b16 %v248
  %v322 = vunpack.c.l.b16 %v249
  %v323 = vunpack.c.l.b16 %v250
  %v324 = vunpack.c.l.b16 %v251
  %v325 = vunpack.c.l.b16 %v252
  %v326 = vunpack.c.l.b16 %v253
  %v327 = vunpack.c.l.b16 %v254
  %v328 = vunpack.c.l.b16 %v255
  %v329 = vunpack.c.l.b16 %v256
  %v330 = vunpack.c.l.b16 %v257
  %v331 = vunpack.c.l.b16 %v258
  %v332 = vunpack.c.l.b16 %v259
  %v333 = vunpack.c.l.b16 %v260
  %v334 = vunpack.c.l.b16 %v261
  %v335 = vunpack.c.l.b16 %v262
  %v336 = vunpack.c.l.b16 %v263
  %v337 = vunpack.c.l.b16 %v264
  %v338 = vunpack.c.l.b16 %v265
  %v339 = vunpack.c.l.b16 %v266
  %v340 = vunpack.c.l.b16 %v267
  %v341 = vunpack.c.l.b16 %v268
  %v342 = vunpack.c.l.b16 %v269
  %v343 = vunpack.c.l.b16 %v270
  %v344 = vpack.c.b16 %v312, %v311
  %v345 = vpack.c.b16 %v314, %v313
  %v346 = vpack.c.b16 %v316, %v315
  %v347 = vpack.c.b16 %v318, %v317
  %v348 = vpack.c.b16 %v320, %v319
  %v349 = vpack.c.b16 %v322, %v321
  %v350 = vpack.c.b16 %v324, %v323
  %v351 = vpack.c.b16 %v326, %v325
  %v352 = vpack.c.b16 %v328, %v327
  %v353 = vpack.c.b16 %v330, %v329
  %v354 = vpack.c.b16 %v332, %v331
  %v355 = vpack.c.b16 %v334, %v333
  %v356 = vpack.c.b16 %v336, %v335
  %v357 = vpack.c.b16 %v338, %v337
  %v358 = vpack.c.b16 %v340, %v339
  %v359 = vpack.c.b16 %v342, %v341
  %v360 = vpack.c.b16 %v343, %v343
  %vm377 = vcmask 31744
  %v379 = vsel %vm377, %v168, 0
  %v382 = vsel %vm377, %v171, 0
  %v385 = vsel %vm377, %v174, 0
  %v388 = vsel %vm377, %v177, 0
  %v391 = vsel %vm377, %v180, 0
  %v394 = vsel %vm377, %v183, 0
  %v397 = vsel %vm377, %v186, 0
  %v400 = vsel %vm377, %v189, 0
  %v403 = vsel %vm377, %v192, 0
  %v406 = vsel %vm377, %v195, 0
  %v409 = vsel %vm377, %v198, 0
  %v412 = vsel %vm377, %v201, 0
  %v415 = vsel %vm377, %v204, 0
  %v418 = vsel %vm377, %v207, 0
  %v421 = vsel %vm377, %v210, 0
  %v424 = vsel %vm377, %v213, 0
  %v427 = vsel %vm377, %v216, 0
  %v430 = vsel %vm377, %v219, 0
  %v433 = vsel %vm377, %v222, 0
  %v436 = vsel %vm377, %v225, 0
  %v439 = vsel %vm377, %v228, 0
  %v442 = vsel %vm377, %v231, 0
  %v445 = vsel %vm377, %v234, 0
  %v448 = vsel %vm377, %v237, 0
  %vm450 = vcmask 1041408
  %v452 = vsel %vm450, %v360, 0
  %454 = vmatprep.subr.bf16.mxu0 0
  %455 = vmatpush1.bf16.msra.mxu0 %v351
  %456 = vmatprep.subr.bf16.mxu0 0
  %457 = vmatpush1.bf16.msra.mxu0 %v350
  %458 = vmatprep.subr.bf16.mxu0 0
  %459 = vmatpush1.bf16.msra.mxu0 %v349
  %460 = vmatprep.subr.bf16.mxu0 0
  %461 = vmatpush1.bf16.msra.mxu0 %v348
  %462 = vmatprep.subr.bf16.mxu0 0
  %463 = vmatpush1.bf16.msra.mxu0 %v347
  %464 = vmatprep.subr.bf16.mxu0 0
  %465 = vmatpush1.bf16.msra.mxu0 %v346
  %466 = vmatprep.subr.bf16.mxu0 0
  %467 = vmatpush1.bf16.msra.mxu0 %v345
  %468 = vmatprep.subr.bf16.mxu0 0
  %469 = vmatpush1.bf16.msra.mxu0 %v344
  %470 = vmatprep.subr.bf16.mxu0 0
  %471 = vmatpush2.bf16.msra.mxu0 %v359
  %472 = vmatprep.subr.bf16.mxu0 0
  %473 = vmatpush2.bf16.msra.mxu0 %v358
  %474 = vmatprep.subr.bf16.mxu0 0
  %475 = vmatpush2.bf16.msra.mxu0 %v357
  %476 = vmatprep.subr.bf16.mxu0 0
  %477 = vmatpush2.bf16.msra.mxu0 %v356
  %478 = vmatprep.subr.bf16.mxu0 0
  %479 = vmatpush2.bf16.msra.mxu0 %v355
  %480 = vmatprep.subr.bf16.mxu0 0
  %481 = vmatpush2.bf16.msra.mxu0 %v354
  %482 = vmatprep.subr.bf16.mxu0 0
  %483 = vmatpush2.bf16.msra.mxu0 %v353
  %484 = vmatprep.subr.bf16.mxu0 0
  %485 = vmatpush2.bf16.msra.mxu0 %v352
  %486 = vmatprep.mubr.bf16.mxu0 %v167
  %487 = vmatmul.mubr.bf16.gmra.mxu0 %v166
  %v488 = vpop.f32.mrf.mxu0
  %v489 = vadd.f32 %v276, %v488
  %v490 = vpop.f32.mrf.mxu0
  %v491 = vpop.f32.mrf.mxu0
  %v492 = vadd.f32 %v276, %v491
  %v493 = vpop.f32.mrf.mxu0
  %494 = vmatprep.mubr.bf16.mxu0 %v170
  %495 = vmatmul.mubr.bf16.gmra.mxu0 %v169
  %v496 = vpop.f32.mrf.mxu0
  %v497 = vadd.f32 %v276, %v496
  %v498 = vpop.f32.mrf.mxu0
  %v499 = vpop.f32.mrf.mxu0
  %v500 = vadd.f32 %v276, %v499
  %v501 = vpop.f32.mrf.mxu0
  %502 = vmatprep.mubr.bf16.mxu0 %v173
  %503 = vmatmul.mubr.bf16.gmra.mxu0 %v172
  %v504 = vpop.f32.mrf.mxu0
  %v505 = vadd.f32 %v276, %v504
  %v506 = vpop.f32.mrf.mxu0
  %v507 = vpop.f32.mrf.mxu0
  %v508 = vadd.f32 %v276, %v507
  %v509 = vpop.f32.mrf.mxu0
  %510 = vmatprep.mubr.bf16.mxu0 %v176
  %511 = vmatmul.mubr.bf16.gmra.mxu0 %v175
  %v512 = vpop.f32.mrf.mxu0
  %v513 = vadd.f32 %v276, %v512
  %v514 = vpop.f32.mrf.mxu0
  %v515 = vpop.f32.mrf.mxu0
  %v516 = vadd.f32 %v276, %v515
  %v517 = vpop.f32.mrf.mxu0
  %518 = vmatprep.mubr.bf16.mxu0 %v179
  %519 = vmatmul.mubr.bf16.gmra.mxu0 %v178
  %v520 = vpop.f32.mrf.mxu0
  %v521 = vadd.f32 %v276, %v520
  %v522 = vpop.f32.mrf.mxu0
  %v523 = vpop.f32.mrf.mxu0
  %v524 = vadd.f32 %v276, %v523
  %v525 = vpop.f32.mrf.mxu0
  %526 = vmatprep.mubr.bf16.mxu0 %v182
  %527 = vmatmul.mubr.bf16.gmra.mxu0 %v181
  %v528 = vpop.f32.mrf.mxu0
  %v529 = vadd.f32 %v276, %v528
  %v530 = vpop.f32.mrf.mxu0
  %v531 = vpop.f32.mrf.mxu0
  %v532 = vadd.f32 %v276, %v531
  %v533 = vpop.f32.mrf.mxu0
  %534 = vmatprep.mubr.bf16.mxu0 %v185
  %535 = vmatmul.mubr.bf16.gmra.mxu0 %v184
  %v536 = vpop.f32.mrf.mxu0
  %v537 = vadd.f32 %v276, %v536
  %v538 = vpop.f32.mrf.mxu0
  %v539 = vpop.f32.mrf.mxu0
  %v540 = vadd.f32 %v276, %v539
  %v541 = vpop.f32.mrf.mxu0
  %542 = vmatprep.mubr.bf16.mxu0 %v188
  %543 = vmatmul.mubr.bf16.gmra.mxu0 %v187
  %v544 = vpop.f32.mrf.mxu0
  %v545 = vadd.f32 %v276, %v544
  %v546 = vpop.f32.mrf.mxu0
  %v547 = vpop.f32.mrf.mxu0
  %v548 = vadd.f32 %v276, %v547
  %v549 = vpop.f32.mrf.mxu0
  %550 = vmatprep.mubr.bf16.mxu0 %v191
  %551 = vmatmul.mubr.bf16.gmra.mxu0 %v190
  %v552 = vpop.f32.mrf.mxu0
  %v553 = vadd.f32 %v276, %v552
  %v554 = vpop.f32.mrf.mxu0
  %v555 = vpop.f32.mrf.mxu0
  %v556 = vadd.f32 %v276, %v555
  %v557 = vpop.f32.mrf.mxu0
  %558 = vmatprep.mubr.bf16.mxu0 %v194
  %559 = vmatmul.mubr.bf16.gmra.mxu0 %v193
  %v560 = vpop.f32.mrf.mxu0
  %v561 = vadd.f32 %v276, %v560
  %v562 = vpop.f32.mrf.mxu0
  %v563 = vpop.f32.mrf.mxu0
  %v564 = vadd.f32 %v276, %v563
  %v565 = vpop.f32.mrf.mxu0
  %566 = vmatprep.mubr.bf16.mxu0 %v197
  %567 = vmatmul.mubr.bf16.gmra.mxu0 %v196
  %v568 = vpop.f32.mrf.mxu0
  %v569 = vadd.f32 %v276, %v568
  %v570 = vpop.f32.mrf.mxu0
  %v571 = vpop.f32.mrf.mxu0
  %v572 = vadd.f32 %v276, %v571
  %v573 = vpop.f32.mrf.mxu0
  %574 = vmatprep.mubr.bf16.mxu0 %v200
  %575 = vmatmul.mubr.bf16.gmra.mxu0 %v199
  %v576 = vpop.f32.mrf.mxu0
  %v577 = vadd.f32 %v276, %v576
  %v578 = vpop.f32.mrf.mxu0
  %v579 = vpop.f32.mrf.mxu0
  %v580 = vadd.f32 %v276, %v579
  %v581 = vpop.f32.mrf.mxu0
  %582 = vmatprep.mubr.bf16.mxu0 %v203
  %583 = vmatmul.mubr.bf16.gmra.mxu0 %v202
  %v584 = vpop.f32.mrf.mxu0
  %v585 = vadd.f32 %v276, %v584
  %v586 = vpop.f32.mrf.mxu0
  %v587 = vpop.f32.mrf.mxu0
  %v588 = vadd.f32 %v276, %v587
  %v589 = vpop.f32.mrf.mxu0
  %590 = vmatprep.mubr.bf16.mxu0 %v206
  %591 = vmatmul.mubr.bf16.gmra.mxu0 %v205
  %v592 = vpop.f32.mrf.mxu0
  %v593 = vadd.f32 %v276, %v592
  %v594 = vpop.f32.mrf.mxu0
  %v595 = vpop.f32.mrf.mxu0
  %v596 = vadd.f32 %v276, %v595
  %v597 = vpop.f32.mrf.mxu0
  %598 = vmatprep.mubr.bf16.mxu0 %v209
  %599 = vmatmul.mubr.bf16.gmra.mxu0 %v208
  %v600 = vpop.f32.mrf.mxu0
  %v601 = vadd.f32 %v276, %v600
  %v602 = vpop.f32.mrf.mxu0
  %v603 = vpop.f32.mrf.mxu0
  %v604 = vadd.f32 %v276, %v603
  %v605 = vpop.f32.mrf.mxu0
  %606 = vmatprep.mubr.bf16.mxu0 %v212
  %607 = vmatmul.mubr.bf16.gmra.mxu0 %v211
  %v608 = vpop.f32.mrf.mxu0
  %v609 = vadd.f32 %v276, %v608
  %v610 = vpop.f32.mrf.mxu0
  %v611 = vpop.f32.mrf.mxu0
  %v612 = vadd.f32 %v276, %v611
  %v613 = vpop.f32.mrf.mxu0
  %614 = vmatprep.mubr.bf16.mxu0 %v215
  %615 = vmatmul.mubr.bf16.gmra.mxu0 %v214
  %v616 = vpop.f32.mrf.mxu0
  %v617 = vadd.f32 %v276, %v616
  %v618 = vpop.f32.mrf.mxu0
  %v619 = vpop.f32.mrf.mxu0
  %v620 = vadd.f32 %v276, %v619
  %v621 = vpop.f32.mrf.mxu0
  %622 = vmatprep.mubr.bf16.mxu0 %v218
  %623 = vmatmul.mubr.bf16.gmra.mxu0 %v217
  %v624 = vpop.f32.mrf.mxu0
  %v625 = vadd.f32 %v276, %v624
  %v626 = vpop.f32.mrf.mxu0
  %v627 = vpop.f32.mrf.mxu0
  %v628 = vadd.f32 %v276, %v627
  %v629 = vpop.f32.mrf.mxu0
  %630 = vmatprep.mubr.bf16.mxu0 %v221
  %631 = vmatmul.mubr.bf16.gmra.mxu0 %v220
  %v632 = vpop.f32.mrf.mxu0
  %v633 = vadd.f32 %v276, %v632
  %v634 = vpop.f32.mrf.mxu0
  %v635 = vpop.f32.mrf.mxu0
  %v636 = vadd.f32 %v276, %v635
  %v637 = vpop.f32.mrf.mxu0
  %638 = vmatprep.mubr.bf16.mxu0 %v224
  %639 = vmatmul.mubr.bf16.gmra.mxu0 %v223
  %v640 = vpop.f32.mrf.mxu0
  %v641 = vadd.f32 %v276, %v640
  %v642 = vpop.f32.mrf.mxu0
  %v643 = vpop.f32.mrf.mxu0
  %v644 = vadd.f32 %v276, %v643
  %v645 = vpop.f32.mrf.mxu0
  %646 = vmatprep.mubr.bf16.mxu0 %v227
  %647 = vmatmul.mubr.bf16.gmra.mxu0 %v226
  %v648 = vpop.f32.mrf.mxu0
  %v649 = vadd.f32 %v276, %v648
  %v650 = vpop.f32.mrf.mxu0
  %v651 = vpop.f32.mrf.mxu0
  %v652 = vadd.f32 %v276, %v651
  %v653 = vpop.f32.mrf.mxu0
  %654 = vmatprep.mubr.bf16.mxu0 %v230
  %655 = vmatmul.mubr.bf16.gmra.mxu0 %v229
  %v656 = vpop.f32.mrf.mxu0
  %v657 = vadd.f32 %v276, %v656
  %v658 = vpop.f32.mrf.mxu0
  %v659 = vpop.f32.mrf.mxu0
  %v660 = vadd.f32 %v276, %v659
  %v661 = vpop.f32.mrf.mxu0
  %662 = vmatprep.mubr.bf16.mxu0 %v233
  %663 = vmatmul.mubr.bf16.gmra.mxu0 %v232
  %v664 = vpop.f32.mrf.mxu0
  %v665 = vadd.f32 %v276, %v664
  %v666 = vpop.f32.mrf.mxu0
  %v667 = vpop.f32.mrf.mxu0
  %v668 = vadd.f32 %v276, %v667
  %v669 = vpop.f32.mrf.mxu0
  %670 = vmatprep.mubr.bf16.mxu0 %v236
  %671 = vmatmul.mubr.bf16.gmra.mxu0 %v235
  %v672 = vpop.f32.mrf.mxu0
  %v673 = vadd.f32 %v276, %v672
  %v674 = vpop.f32.mrf.mxu0
  %v675 = vpop.f32.mrf.mxu0
  %v676 = vadd.f32 %v276, %v675
  %v677 = vpop.f32.mrf.mxu0
  %678 = vdwg.mxu0
  %679 = vmatprep.subr.bf16.mxu0 0
  %680 = vmatpush1.bf16.msra.mxu0 0
  %681 = vmatprep.subr.bf16.mxu0 0
  %682 = vmatpush1.bf16.msra.mxu0 0
  %683 = vmatprep.subr.bf16.mxu0 0
  %684 = vmatpush1.bf16.msra.mxu0 0
  %685 = vmatprep.subr.bf16.mxu0 0
  %686 = vmatpush1.bf16.msra.mxu0 0
  %687 = vmatprep.subr.bf16.mxu0 0
  %688 = vmatpush1.bf16.msra.mxu0 0
  %689 = vmatprep.subr.bf16.mxu0 0
  %690 = vmatpush1.bf16.msra.mxu0 0
  %691 = vmatprep.subr.bf16.mxu0 0
  %692 = vmatpush1.bf16.msra.mxu0 0
  %693 = vmatprep.subr.bf16.mxu0 0
  %694 = vmatpush1.bf16.msra.mxu0 %v452
  %695 = vmatprep.subr.bf16.mxu0 0
  %696 = vmatpush2.bf16.msra.mxu0 0
  %697 = vmatprep.subr.bf16.mxu0 0
  %698 = vmatpush2.bf16.msra.mxu0 0
  %699 = vmatprep.subr.bf16.mxu0 0
  %700 = vmatpush2.bf16.msra.mxu0 0
  %701 = vmatprep.subr.bf16.mxu0 0
  %702 = vmatpush2.bf16.msra.mxu0 0
  %703 = vmatprep.subr.bf16.mxu0 0
  %704 = vmatpush2.bf16.msra.mxu0 0
  %705 = vmatprep.subr.bf16.mxu0 0
  %706 = vmatpush2.bf16.msra.mxu0 0
  %707 = vmatprep.subr.bf16.mxu0 0
  %708 = vmatpush2.bf16.msra.mxu0 0
  %709 = vmatprep.subr.bf16.mxu0 0
  %710 = vmatpush2.bf16.msra.mxu0 0
  %711 = vmatprep.mubr.bf16.mxu0 0
  %712 = vmatmul.mubr.bf16.gmra.mxu0 %v379
  %v713 = vpop.f32.mrf.mxu0
  %v714 = vadd.f32 %v489, %v713
  %v715 = vpop.f32.mrf.mxu0
  %v716 = vpop.f32.mrf.mxu0
  %v717 = vadd.f32 %v492, %v716
  %v718 = vpop.f32.mrf.mxu0
  %719 = vmatprep.mubr.bf16.mxu0 0
  %720 = vmatmul.mubr.bf16.gmra.mxu0 %v382
  %v721 = vpop.f32.mrf.mxu0
  %v722 = vadd.f32 %v497, %v721
  %v723 = vpop.f32.mrf.mxu0
  %v724 = vpop.f32.mrf.mxu0
  %v725 = vadd.f32 %v500, %v724
  %v726 = vpop.f32.mrf.mxu0
  %727 = vmatprep.mubr.bf16.mxu0 0
  %728 = vmatmul.mubr.bf16.gmra.mxu0 %v385
  %v729 = vpop.f32.mrf.mxu0
  %v730 = vadd.f32 %v505, %v729
  %v731 = vpop.f32.mrf.mxu0
  %v732 = vpop.f32.mrf.mxu0
  %v733 = vadd.f32 %v508, %v732
  %v734 = vpop.f32.mrf.mxu0
  %735 = vmatprep.mubr.bf16.mxu0 0
  %736 = vmatmul.mubr.bf16.gmra.mxu0 %v388
  %v737 = vpop.f32.mrf.mxu0
  %v738 = vadd.f32 %v513, %v737
  %v739 = vpop.f32.mrf.mxu0
  %v740 = vpop.f32.mrf.mxu0
  %v741 = vadd.f32 %v516, %v740
  %v742 = vpop.f32.mrf.mxu0
  %743 = vmatprep.mubr.bf16.mxu0 0
  %744 = vmatmul.mubr.bf16.gmra.mxu0 %v391
  %v745 = vpop.f32.mrf.mxu0
  %v746 = vadd.f32 %v521, %v745
  %v747 = vpop.f32.mrf.mxu0
  %v748 = vpop.f32.mrf.mxu0
  %v749 = vadd.f32 %v524, %v748
  %v750 = vpop.f32.mrf.mxu0
  %751 = vmatprep.mubr.bf16.mxu0 0
  %752 = vmatmul.mubr.bf16.gmra.mxu0 %v394
  %v753 = vpop.f32.mrf.mxu0
  %v754 = vadd.f32 %v529, %v753
  %v755 = vpop.f32.mrf.mxu0
  %v756 = vpop.f32.mrf.mxu0
  %v757 = vadd.f32 %v532, %v756
  %v758 = vpop.f32.mrf.mxu0
  %759 = vmatprep.mubr.bf16.mxu0 0
  %760 = vmatmul.mubr.bf16.gmra.mxu0 %v397
  %v761 = vpop.f32.mrf.mxu0
  %v762 = vadd.f32 %v537, %v761
  %v763 = vpop.f32.mrf.mxu0
  %v764 = vpop.f32.mrf.mxu0
  %v765 = vadd.f32 %v540, %v764
  %v766 = vpop.f32.mrf.mxu0
  %767 = vmatprep.mubr.bf16.mxu0 0
  %768 = vmatmul.mubr.bf16.gmra.mxu0 %v400
  %v769 = vpop.f32.mrf.mxu0
  %v770 = vadd.f32 %v545, %v769
  %v771 = vpop.f32.mrf.mxu0
  %v772 = vpop.f32.mrf.mxu0
  %v773 = vadd.f32 %v548, %v772
  %v774 = vpop.f32.mrf.mxu0
  %775 = vmatprep.mubr.bf16.mxu0 0
  %776 = vmatmul.mubr.bf16.gmra.mxu0 %v403
  %v777 = vpop.f32.mrf.mxu0
  %v778 = vadd.f32 %v553, %v777
  %v779 = vpop.f32.mrf.mxu0
  %v780 = vpop.f32.mrf.mxu0
  %v781 = vadd.f32 %v556, %v780
  %v782 = vpop.f32.mrf.mxu0
  %783 = vmatprep.mubr.bf16.mxu0 0
  %784 = vmatmul.mubr.bf16.gmra.mxu0 %v406
  %v785 = vpop.f32.mrf.mxu0
  %v786 = vadd.f32 %v561, %v785
  %v787 = vpop.f32.mrf.mxu0
  %v788 = vpop.f32.mrf.mxu0
  %v789 = vadd.f32 %v564, %v788
  %v790 = vpop.f32.mrf.mxu0
  %791 = vmatprep.mubr.bf16.mxu0 0
  %792 = vmatmul.mubr.bf16.gmra.mxu0 %v409
  %v793 = vpop.f32.mrf.mxu0
  %v794 = vadd.f32 %v569, %v793
  %v795 = vpop.f32.mrf.mxu0
  %v796 = vpop.f32.mrf.mxu0
  %v797 = vadd.f32 %v572, %v796
  %v798 = vpop.f32.mrf.mxu0
  %799 = vmatprep.mubr.bf16.mxu0 0
  %800 = vmatmul.mubr.bf16.gmra.mxu0 %v412
  %v801 = vpop.f32.mrf.mxu0
  %v802 = vadd.f32 %v577, %v801
  %v803 = vpop.f32.mrf.mxu0
  %v804 = vpop.f32.mrf.mxu0
  %v805 = vadd.f32 %v580, %v804
  %v806 = vpop.f32.mrf.mxu0
  %807 = vmatprep.mubr.bf16.mxu0 0
  %808 = vmatmul.mubr.bf16.gmra.mxu0 %v415
  %v809 = vpop.f32.mrf.mxu0
  %v810 = vadd.f32 %v585, %v809
  %v811 = vpop.f32.mrf.mxu0
  %v812 = vpop.f32.mrf.mxu0
  %v813 = vadd.f32 %v588, %v812
  %v814 = vpop.f32.mrf.mxu0
  %815 = vmatprep.mubr.bf16.mxu0 0
  %816 = vmatmul.mubr.bf16.gmra.mxu0 %v418
  %v817 = vpop.f32.mrf.mxu0
  %v818 = vadd.f32 %v593, %v817
  %v819 = vpop.f32.mrf.mxu0
  %v820 = vpop.f32.mrf.mxu0
  %v821 = vadd.f32 %v596, %v820
  %v822 = vpop.f32.mrf.mxu0
  %823 = vmatprep.mubr.bf16.mxu0 0
  %824 = vmatmul.mubr.bf16.gmra.mxu0 %v421
  %v825 = vpop.f32.mrf.mxu0
  %v826 = vadd.f32 %v601, %v825
  %v827 = vpop.f32.mrf.mxu0
  %v828 = vpop.f32.mrf.mxu0
  %v829 = vadd.f32 %v604, %v828
  %v830 = vpop.f32.mrf.mxu0
  %831 = vmatprep.mubr.bf16.mxu0 0
  %832 = vmatmul.mubr.bf16.gmra.mxu0 %v424
  %v833 = vpop.f32.mrf.mxu0
  %v834 = vadd.f32 %v609, %v833
  %v835 = vpop.f32.mrf.mxu0
  %v836 = vpop.f32.mrf.mxu0
  %v837 = vadd.f32 %v612, %v836
  %v838 = vpop.f32.mrf.mxu0
  %839 = vmatprep.mubr.bf16.mxu0 0
  %840 = vmatmul.mubr.bf16.gmra.mxu0 %v427
  %v841 = vpop.f32.mrf.mxu0
  %v842 = vadd.f32 %v617, %v841
  %v843 = vpop.f32.mrf.mxu0
  %v844 = vpop.f32.mrf.mxu0
  %v845 = vadd.f32 %v620, %v844
  %v846 = vpop.f32.mrf.mxu0
  %847 = vmatprep.mubr.bf16.mxu0 0
  %848 = vmatmul.mubr.bf16.gmra.mxu0 %v430
  %v849 = vpop.f32.mrf.mxu0
  %v850 = vadd.f32 %v625, %v849
  %v851 = vpop.f32.mrf.mxu0
  %v852 = vpop.f32.mrf.mxu0
  %v853 = vadd.f32 %v628, %v852
  %v854 = vpop.f32.mrf.mxu0
  %855 = vmatprep.mubr.bf16.mxu0 0
  %856 = vmatmul.mubr.bf16.gmra.mxu0 %v433
  %v857 = vpop.f32.mrf.mxu0
  %v858 = vadd.f32 %v633, %v857
  %v859 = vpop.f32.mrf.mxu0
  %v860 = vpop.f32.mrf.mxu0
  %v861 = vadd.f32 %v636, %v860
  %v862 = vpop.f32.mrf.mxu0
  %863 = vmatprep.mubr.bf16.mxu0 0
  %864 = vmatmul.mubr.bf16.gmra.mxu0 %v436
  %v865 = vpop.f32.mrf.mxu0
  %v866 = vadd.f32 %v641, %v865
  %v867 = vpop.f32.mrf.mxu0
  %v868 = vpop.f32.mrf.mxu0
  %v869 = vadd.f32 %v644, %v868
  %v870 = vpop.f32.mrf.mxu0
  %871 = vmatprep.mubr.bf16.mxu0 0
  %872 = vmatmul.mubr.bf16.gmra.mxu0 %v439
  %v873 = vpop.f32.mrf.mxu0
  %v874 = vadd.f32 %v649, %v873
  %v875 = vpop.f32.mrf.mxu0
  %v876 = vpop.f32.mrf.mxu0
  %v877 = vadd.f32 %v652, %v876
  %v878 = vpop.f32.mrf.mxu0
  %879 = vmatprep.mubr.bf16.mxu0 0
  %880 = vmatmul.mubr.bf16.gmra.mxu0 %v442
  %v881 = vpop.f32.mrf.mxu0
  %v882 = vadd.f32 %v657, %v881
  %v883 = vpop.f32.mrf.mxu0
  %v884 = vpop.f32.mrf.mxu0
  %v885 = vadd.f32 %v660, %v884
  %v886 = vpop.f32.mrf.mxu0
  %887 = vmatprep.mubr.bf16.mxu0 0
  %888 = vmatmul.mubr.bf16.gmra.mxu0 %v445
  %v889 = vpop.f32.mrf.mxu0
  %v890 = vadd.f32 %v665, %v889
  %v891 = vpop.f32.mrf.mxu0
  %v892 = vpop.f32.mrf.mxu0
  %v893 = vadd.f32 %v668, %v892
  %v894 = vpop.f32.mrf.mxu0
  %895 = vmatprep.mubr.bf16.mxu0 0
  %896 = vmatmul.mubr.bf16.gmra.mxu0 %v448
  %v897 = vpop.f32.mrf.mxu0
  %v898 = vadd.f32 %v673, %v897
  %v899 = vpop.f32.mrf.mxu0
  %v900 = vpop.f32.mrf.mxu0
  %v901 = vadd.f32 %v676, %v900
  %v902 = vpop.f32.mrf.mxu0
  %903 = vdwg.mxu0
  %v904 = vmax.f32 %v714, 0.0
  %v905 = vmax.f32 %v717, 0.0
  %v906 = vmax.f32 %v722, 0.0
  %v907 = vmax.f32 %v725, 0.0
  %v908 = vmax.f32 %v730, 0.0
  %v909 = vmax.f32 %v733, 0.0
  %v910 = vmax.f32 %v738, 0.0
  %v911 = vmax.f32 %v741, 0.0
  %v912 = vmax.f32 %v746, 0.0
  %v913 = vmax.f32 %v749, 0.0
  %v914 = vmax.f32 %v754, 0.0
  %v915 = vmax.f32 %v757, 0.0
  %v916 = vmax.f32 %v762, 0.0
  %v917 = vmax.f32 %v765, 0.0
  %v918 = vmax.f32 %v770, 0.0
  %v919 = vmax.f32 %v773, 0.0
  %v920 = vmax.f32 %v778, 0.0
  %v921 = vmax.f32 %v781, 0.0
  %v922 = vmax.f32 %v786, 0.0
  %v923 = vmax.f32 %v789, 0.0
  %v924 = vmax.f32 %v794, 0.0
  %v925 = vmax.f32 %v797, 0.0
  %v926 = vmax.f32 %v802, 0.0
  %v927 = vmax.f32 %v805, 0.0
  %v928 = vmax.f32 %v810, 0.0
  %v929 = vmax.f32 %v813, 0.0
  %v930 = vmax.f32 %v818, 0.0
  %v931 = vmax.f32 %v821, 0.0
  %v932 = vmax.f32 %v826, 0.0
  %v933 = vmax.f32 %v829, 0.0
  %v934 = vmax.f32 %v834, 0.0
  %v935 = vmax.f32 %v837, 0.0
  %v936 = vmax.f32 %v842, 0.0
  %v937 = vmax.f32 %v845, 0.0
  %v938 = vmax.f32 %v850, 0.0
  %v939 = vmax.f32 %v853, 0.0
  %v940 = vmax.f32 %v858, 0.0
  %v941 = vmax.f32 %v861, 0.0
  %v942 = vmax.f32 %v866, 0.0
  %v943 = vmax.f32 %v869, 0.0
  %v944 = vmax.f32 %v874, 0.0
  %v945 = vmax.f32 %v877, 0.0
  %v946 = vmax.f32 %v882, 0.0
  %v947 = vmax.f32 %v885, 0.0
  %v948 = vmax.f32 %v890, 0.0
  %v949 = vmax.f32 %v893, 0.0
  %v950 = vmax.f32 %v898, 0.0
  %v951 = vmax.f32 %v901, 0.0
  %v952 = vld [vmem:[%s3] sm:$0x1]
  %s953 = sld [smem:[#allocation2]]
  %v954 = vstv %s953
  %vm955 = vcmask 261120
  %v957 = vsel %vm955, %v952, 0
  %v960 = vsel %vm955, %v904, 0
  %v963 = vsel %vm955, %v905, 0
  %v966 = vsel %vm955, %v906, 0
  %v969 = vsel %vm955, %v907, 0
  %v972 = vsel %vm955, %v908, 0
  %v975 = vsel %vm955, %v909, 0
  %v978 = vsel %vm955, %v910, 0
  %v981 = vsel %vm955, %v911, 0
  %v984 = vsel %vm955, %v912, 0
  %v987 = vsel %vm955, %v913, 0
  %v990 = vsel %vm955, %v914, 0
  %v993 = vsel %vm955, %v915, 0
  %v996 = vsel %vm955, %v916, 0
  %v999 = vsel %vm955, %v917, 0
  %v1002 = vsel %vm955, %v918, 0
  %v1005 = vsel %vm955, %v919, 0
  %v1008 = vsel %vm955, %v920, 0
  %v1011 = vsel %vm955, %v921, 0
  %v1014 = vsel %vm955, %v922, 0
  %v1017 = vsel %vm955, %v923, 0
  %v1020 = vsel %vm955, %v924, 0
  %v1023 = vsel %vm955, %v925, 0
  %v1026 = vsel %vm955, %v926, 0
  %v1029 = vsel %vm955, %v927, 0
  %v1032 = vsel %vm955, %v928, 0
  %v1035 = vsel %vm955, %v929, 0
  %v1038 = vsel %vm955, %v930, 0
  %v1041 = vsel %vm955, %v931, 0
  %v1044 = vsel %vm955, %v932, 0
  %v1047 = vsel %vm955, %v933, 0
  %v1050 = vsel %vm955, %v934, 0
  %v1053 = vsel %vm955, %v935, 0
  %v1056 = vsel %vm955, %v936, 0
  %v1059 = vsel %vm955, %v937, 0
  %v1062 = vsel %vm955, %v938, 0
  %v1065 = vsel %vm955, %v939, 0
  %v1068 = vsel %vm955, %v940, 0
  %v1071 = vsel %vm955, %v941, 0
  %v1074 = vsel %vm955, %v942, 0
  %v1077 = vsel %vm955, %v943, 0
  %v1080 = vsel %vm955, %v944, 0
  %v1083 = vsel %vm955, %v945, 0
  %v1086 = vsel %vm955, %v946, 0
  %v1089 = vsel %vm955, %v947, 0
  %v1092 = vsel %vm955, %v948, 0
  %v1095 = vsel %vm955, %v949, 0
  %v1098 = vsel %vm955, %v950, 0
  %v1101 = vsel %vm955, %v951, 0
  %1103 = vmatprep.subr.mxu0 0.0
  %1104 = vmatpush1.xpose.msra.mxu0 %v1005
  %1105 = vmatprep.subr.mxu0 0.0
  %1106 = vmatpush1.xpose.msra.mxu0 %v1002
  %1107 = vmatprep.subr.mxu0 0.0
  %1108 = vmatpush1.xpose.msra.mxu0 %v999
  %1109 = vmatprep.subr.mxu0 0.0
  %1110 = vmatpush1.xpose.msra.mxu0 %v996
  %1111 = vmatprep.subr.mxu0 0.0
  %1112 = vmatpush1.xpose.msra.mxu0 %v993
  %1113 = vmatprep.subr.mxu0 0.0
  %1114 = vmatpush1.xpose.msra.mxu0 %v990
  %1115 = vmatprep.subr.mxu0 0.0
  %1116 = vmatpush1.xpose.msra.mxu0 %v987
  %1117 = vmatprep.subr.mxu0 0.0
  %1118 = vmatpush1.xpose.msra.mxu0 %v984
  %1119 = vmatprep.subr.mxu0 0.0
  %1120 = vmatpush1.xpose.msra.mxu0 %v981
  %1121 = vmatprep.subr.mxu0 0.0
  %1122 = vmatpush1.xpose.msra.mxu0 %v978
  %1123 = vmatprep.subr.mxu0 0.0
  %1124 = vmatpush1.xpose.msra.mxu0 %v975
  %1125 = vmatprep.subr.mxu0 0.0
  %1126 = vmatpush1.xpose.msra.mxu0 %v972
  %1127 = vmatprep.subr.mxu0 0.0
  %1128 = vmatpush1.xpose.msra.mxu0 %v969
  %1129 = vmatprep.subr.mxu0 0.0
  %1130 = vmatpush1.xpose.msra.mxu0 %v966
  %1131 = vmatprep.subr.mxu0 0.0
  %1132 = vmatpush1.xpose.msra.mxu0 %v963
  %1133 = vmatprep.subr.mxu0 0.0
  %1134 = vmatpush1.xpose.msra.mxu0 %v960
  %1135 = vmatprep.subr.mxu0 0.0
  %1136 = vmatpush2.xpose.msra.mxu0 %v1053
  %1137 = vmatprep.subr.mxu0 0.0
  %1138 = vmatpush2.xpose.msra.mxu0 %v1050
  %1139 = vmatprep.subr.mxu0 0.0
  %1140 = vmatpush2.xpose.msra.mxu0 %v1047
  %1141 = vmatprep.subr.mxu0 0.0
  %1142 = vmatpush2.xpose.msra.mxu0 %v1044
  %1143 = vmatprep.subr.mxu0 0.0
  %1144 = vmatpush2.xpose.msra.mxu0 %v1041
  %1145 = vmatprep.subr.mxu0 0.0
  %1146 = vmatpush2.xpose.msra.mxu0 %v1038
  %1147 = vmatprep.subr.mxu0 0.0
  %1148 = vmatpush2.xpose.msra.mxu0 %v1035
  %1149 = vmatprep.subr.mxu0 0.0
  %1150 = vmatpush2.xpose.msra.mxu0 %v1032
  %1151 = vmatprep.subr.mxu0 0.0
  %1152 = vmatpush2.xpose.msra.mxu0 %v1029
  %1153 = vmatprep.subr.mxu0 0.0
  %1154 = vmatpush2.xpose.msra.mxu0 %v1026
  %1155 = vmatprep.subr.mxu0 0.0
  %1156 = vmatpush2.xpose.msra.mxu0 %v1023
  %1157 = vmatprep.subr.mxu0 0.0
  %1158 = vmatpush2.xpose.msra.mxu0 %v1020
  %1159 = vmatprep.subr.mxu0 0.0
  %1160 = vmatpush2.xpose.msra.mxu0 %v1017
  %1161 = vmatprep.subr.mxu0 0.0
  %1162 = vmatpush2.xpose.msra.mxu0 %v1014
  %1163 = vmatprep.subr.mxu0 0.0
  %1164 = vmatpush2.xpose.msra.mxu0 %v1011
  %1165 = vmatprep.subr.mxu0 0.0
  %1166 = vmatpush2.xpose.msra.mxu0 %v1008
  %1167 = vmatprep.mubr.f32.mxu0 0.0
  %1168 = vmatmul.mubr.f32.gmra.mxu0 %v957
  %v1169 = vpop.f32.mrf.mxu0
  %v1170 = vadd.f32 %v954, %v1169
  %v1171 = vpop.f32.mrf.mxu0
  %v1172 = vadd.f32 %v954, %v1171
  %1173 = vdwg.mxu0
  %1174 = vmatprep.subr.mxu0 0.0
  %1175 = vmatpush1.xpose.msra.mxu0 %v1101
  %1176 = vmatprep.subr.mxu0 0.0
  %1177 = vmatpush1.xpose.msra.mxu0 %v1098
  %1178 = vmatprep.subr.mxu0 0.0
  %1179 = vmatpush1.xpose.msra.mxu0 %v1095
  %1180 = vmatprep.subr.mxu0 0.0
  %1181 = vmatpush1.xpose.msra.mxu0 %v1092
  %1182 = vmatprep.subr.mxu0 0.0
  %1183 = vmatpush1.xpose.msra.mxu0 %v1089
  %1184 = vmatprep.subr.mxu0 0.0
  %1185 = vmatpush1.xpose.msra.mxu0 %v1086
  %1186 = vmatprep.subr.mxu0 0.0
  %1187 = vmatpush1.xpose.msra.mxu0 %v1083
  %1188 = vmatprep.subr.mxu0 0.0
  %1189 = vmatpush1.xpose.msra.mxu0 %v1080
  %1190 = vmatprep.subr.mxu0 0.0
  %1191 = vmatpush1.xpose.msra.mxu0 %v1077
  %1192 = vmatprep.subr.mxu0 0.0
  %1193 = vmatpush1.xpose.msra.mxu0 %v1074
  %1194 = vmatprep.subr.mxu0 0.0
  %1195 = vmatpush1.xpose.msra.mxu0 %v1071
  %1196 = vmatprep.subr.mxu0 0.0
  %1197 = vmatpush1.xpose.msra.mxu0 %v1068
  %1198 = vmatprep.subr.mxu0 0.0
  %1199 = vmatpush1.xpose.msra.mxu0 %v1065
  %1200 = vmatprep.subr.mxu0 0.0
  %1201 = vmatpush1.xpose.msra.mxu0 %v1062
  %1202 = vmatprep.subr.mxu0 0.0
  %1203 = vmatpush1.xpose.msra.mxu0 %v1059
  %1204 = vmatprep.subr.mxu0 0.0
  %1205 = vmatpush1.xpose.msra.mxu0 %v1056
  %1206 = vmatprep.subr.mxu0 0.0
  %1207 = vmatpush2.xpose.msra.mxu0 0.0
  %1208 = vmatprep.subr.mxu0 0.0
  %1209 = vmatpush2.xpose.msra.mxu0 0.0
  %1210 = vmatprep.subr.mxu0 0.0
  %1211 = vmatpush2.xpose.msra.mxu0 0.0
  %1212 = vmatprep.subr.mxu0 0.0
  %1213 = vmatpush2.xpose.msra.mxu0 0.0
  %1214 = vmatprep.subr.mxu0 0.0
  %1215 = vmatpush2.xpose.msra.mxu0 0.0
  %1216 = vmatprep.subr.mxu0 0.0
  %1217 = vmatpush2.xpose.msra.mxu0 0.0
  %1218 = vmatprep.subr.mxu0 0.0
  %1219 = vmatpush2.xpose.msra.mxu0 0.0
  %1220 = vmatprep.subr.mxu0 0.0
  %1221 = vmatpush2.xpose.msra.mxu0 0.0
  %1222 = vmatprep.subr.mxu0 0.0
  %1223 = vmatpush2.xpose.msra.mxu0 0.0
  %1224 = vmatprep.subr.mxu0 0.0
  %1225 = vmatpush2.xpose.msra.mxu0 0.0
  %1226 = vmatprep.subr.mxu0 0.0
  %1227 = vmatpush2.xpose.msra.mxu0 0.0
  %1228 = vmatprep.subr.mxu0 0.0
  %1229 = vmatpush2.xpose.msra.mxu0 0.0
  %1230 = vmatprep.subr.mxu0 0.0
  %1231 = vmatpush2.xpose.msra.mxu0 0.0
  %1232 = vmatprep.subr.mxu0 0.0
  %1233 = vmatpush2.xpose.msra.mxu0 0.0
  %1234 = vmatprep.subr.mxu0 0.0
  %1235 = vmatpush2.xpose.msra.mxu0 0.0
  %1236 = vmatprep.subr.mxu0 0.0
  %1237 = vmatpush2.xpose.msra.mxu0 0.0
  %1238 = vmatprep.mubr.f32.mxu0 0.0
  %1239 = vmatmul.mubr.f32.gmra.mxu0 %v957
  %v1240 = vpop.f32.mrf.mxu0
  %v1241 = vadd.f32 %v954, %v1240
  %v1242 = vpop.f32.mrf.mxu0
  %1243 = vdwg.mxu0
  %v1247 = vcombine.low %v1170, %v1172
  %v1249 = vunpack.c.l.s4 1966171168
  %v1250 = vunpack.c.0.s8 %v1249
  %v1251 = vlaneseq
  %v1252 = vshrl.u32 %v1251, 7
  %v1253 = vsub.s32 %v1250, %v1252
  %v1254 = vrot.slane %v1247, %v1253
  %v1256 = vunpack.c.l.s4 1966171168
  %v1257 = vunpack.c.0.s8 %v1256
  %v1258 = vlaneseq
  %v1259 = vshrl.u32 %v1258, 7
  %v1260 = vsub.s32 %v1257, %v1259
  %v1261 = vrot.slane %v1241, %v1260
  %v1262 = vcombine.low %v1254, %v1261
  %v1264 = vunpack.c.l.s4 1966171168
  %v1265 = vunpack.c.0.s8 %v1264
  %v1266 = vlaneseq
  %v1267 = vshrl.u32 %v1266, 7
  %v1268 = vsub.s32 %v1265, %v1267
  %v1269 = vrot.slane %v1262, %v1268
  %v1271 = vlaneseq
  %vm1272 = vcmp.ge.s32.totalorder %v1271, 0
  %vm1273 = vcmp.lt.s32.totalorder %v1271, 384
  %vm1274 = vmand %vm1272, %vm1273
  %1275 = vst.msk [vmem:[%s5] sm:$0x7] %vm1274, %v1269
  // Predicated region
  $region22: #{selector_forward.1} parent=0 // pred_check
    _
  $region23: #{selector_forward.1} parent=0 // pred_check_branch
    %1277 = sbr.rel (0) target = $region25
  $region24: #{selector_forward.1} parent=0 // pred_region
    _
  $region25: #{selector_forward.1} parent=0 // pred_fallthru
    _
  // Predicated region
  $region26: #{selector_forward.1} parent=0 // pred_check
    _
  $region27: #{selector_forward.1} parent=0 // pred_check_branch
    %1279 = sbr.rel (0) target = $region29
  $region28: #{selector_forward.1} parent=0 // pred_region
    _
  $region29: #{selector_forward.1} parent=0 // pred_fallthru
    _

</llo_original>
